<compile_context>
chip_gen: v7x
topology: tpu7x:2x2x1
jax: 0.10.0
libtpu: 0.0.40
codegen_flags: <defaults>
</compile_context>

<pallas_src>
import functools

import jax
import jax.numpy as jnp
from jax import lax
from jax.experimental import pallas as pl
from jax.experimental.pallas import tpu as pltpu


def _lrn_kernel(*refs, local_size, alpha_eff, beta, bn, channels, use_band):
    # refs: (band_ref?, x_ref, o_ref); band only present on the MXU path.
    if use_band:
        band_ref, x_ref, o_ref = refs
        band = band_ref[...]                       # (C, C) 0/1 window matrix
    else:
        x_ref, o_ref = refs

    pad = (local_size - 1) // 2

    # Large-C path: precompute per-shift "genuine distance-o neighbour" masks
    # once per grid step (shared across the batch sub-blocks).  The mask is
    # derived from a rolled channel-index map, so it is correct regardless of
    # pltpu.roll's shift-direction convention.
    roll_masks = []
    if local_size > 1 and not use_band:
        tile_shape = (x_ref.shape[1], x_ref.shape[2])          # (C, TILE_HW)
        cidx = lax.broadcasted_iota(jnp.int32, tile_shape, 0)
        for o in range(1, min(pad, channels - 1) + 1):
            shifts = {o % channels, (channels - o) % channels}
            for sh in sorted(shifts):
                if sh == 0:
                    continue
                src = pltpu.roll(cidx, shift=sh, axis=0)       # source channel
                roll_masks.append((sh, jnp.abs(src - cidx) == o))

    for b in range(bn):                            # static, bn <= 8
        x = x_ref[b].astype(jnp.float32)           # (C, TILE_HW)
        sq = x * x

        if local_size == 1:
            wsum = sq                              # kernel_size=1 window
        elif use_band:
            # MXU path: one (C,C)x(C,T) matmul does the zero-padded
            # cross-channel window sum.  HIGHEST precision avoids bf16
            # demotion of the f32 operands.
            wsum = jnp.dot(band, sq, preferred_element_type=jnp.float32,
                           precision=lax.Precision.HIGHEST)
        else:
            # Large-C path: (local_size-1) sublane rolls + masked VPU adds;
            # XLU/VPU slots have plenty of slack in the mem-bound regime.
            wsum = sq
            for sh, mask in roll_masks:
                wsum = wsum + jnp.where(
                    mask, pltpu.roll(sq, shift=sh, axis=0), 0.0)

        # LRN divisor: (1 + (alpha/L) * window_sum) ** beta ; out = x / div.
        t = 1.0 + alpha_eff * wsum                 # >= 1 for alpha >= 0
        if beta == 0.75:
            r = lax.rsqrt(t)                       # t^-0.5
            inv = r * jnp.sqrt(r)                  # t^-0.75: 2 EUP ops, no div
        else:
            inv = jnp.exp(-beta * jnp.log1p(alpha_eff * wsum))   # t^-beta

        o_ref[b] = (x * inv).astype(o_ref.dtype)


def lrn_pallas(x, local_size=1, alpha=1.0, beta=0.75, across_channels=True,
               channel_sum_mode="auto", max_block_elems=None):
    """LRN forward (ACROSS_CHANNELS=True path) as a Pallas TPU kernel."""
    if not across_channels:
        # TODO(synk): ACROSS_CHANNELS=False (spatial AvgPool2d) path not implemented.
        raise NotImplementedError("Only ACROSS_CHANNELS=True is implemented.")
    assert local_size % 2 == 1, "local_size must be odd (standard LRN usage)"

    N, C, H, W = x.shape
    HW = H * W
    x3 = x.reshape(N, C, HW)                       # free reshape (merge trailing dims)

    # ---- Per-generation VMEM budget --------------------------------------
    try:
        info = pltpu.get_tpu_info()
        vmem_cap = int(getattr(info, "vmem_capacity_bytes", 0)) or (64 << 20)
    except Exception:                              # no info -> assume smallest (v7x)
        vmem_cap = 64 << 20
    vmem_limit = int(min(vmem_cap * 3 // 4, 96 << 20))   # 48 MiB v7x / 96 MiB v5e,v6e
    # Footprint per step ~= 4 blocks (double-buffered in+out) + a few
    # block-sized f32 temporaries -> keep one block at ~1/16 of the limit.
    if max_block_elems is None:
        block_budget = max(1 << 20, vmem_limit // 16)
        elem_budget = block_budget // 4            # f32 elements per block
    else:
        elem_budget = int(max_block_elems)         # test hook: force tiny blocks

    # ---- Tile sizing: balanced lane-dense (128-multiple) spatial tiles; ---
    # ---- batch-block small images; no wrapper-side padding (overhang). ----
    padded128 = ((HW + 127) // 128) * 128
    row_elems = C * padded128                      # one image, full spatial extent
    if row_elems >= elem_budget:
        bn = 1
        target_lanes = max(128, (elem_budget // max(C, 1)) // 128 * 128)
        n_tiles = pl.cdiv(padded128, target_lanes)
        tile_hw = pl.cdiv(pl.cdiv(padded128, n_tiles), 128) * 128   # balanced
    else:
        bn = max(1, min(N, elem_budget // row_elems, 8))
        tile_hw = padded128
    # v7x has 2 TensorCores: make sure the "parallel" grid has >= 2 steps.
    if pl.cdiv(N, bn) * pl.cdiv(HW, tile_hw) < 2:
        if N >= 2:
            bn = (bn + 1) // 2
        elif padded128 >= 256:
            tile_hw = pl.cdiv(pl.cdiv(padded128, 2), 128) * 128
    grid = (pl.cdiv(N, bn), pl.cdiv(HW, tile_hw))

    pad = (local_size - 1) // 2
    if channel_sum_mode == "auto":
        use_band = local_size > 1 and C < 256      # MXU band only while it stays cheap
    elif channel_sum_mode == "mxu":
        use_band = local_size > 1
    elif channel_sum_mode == "roll":
        use_band = False
    else:
        raise ValueError(f"unknown channel_sum_mode: {channel_sum_mode}")

    kernel = functools.partial(
        _lrn_kernel, local_size=local_size,
        alpha_eff=float(alpha) / float(local_size),    # fold 1/L into alpha
        beta=float(beta), bn=bn, channels=C, use_band=use_band)

    # NOTE: default depth-2 pipelining; bump to pl.Buffered(3) only if xprof
    # shows exposed input DMA for very small blocks.
    x_spec = pl.BlockSpec((bn, C, tile_hw), lambda n, h: (n, 0, h))
    in_specs = [x_spec]
    args = [x3]
    if use_band:
        i = jnp.arange(C)
        band = (jnp.abs(i[:, None] - i[None, :]) <= pad).astype(jnp.float32)
        in_specs = [pl.BlockSpec((C, C), lambda n, h: (0, 0))] + in_specs
        args = [band] + args

    out = pl.pallas_call(
        kernel,
        out_shape=jax.ShapeDtypeStruct((N, C, HW), x.dtype),
        grid_spec=pltpu.PrefetchScalarGridSpec(
            num_scalar_prefetch=0,
            grid=grid,
            in_specs=in_specs,
            out_specs=x_spec,
        ),
        compiler_params=pltpu.CompilerParams(
            dimension_semantics=("parallel", "parallel"),
            vmem_limit_bytes=vmem_limit,
        ),
    )(*args)

    return out.reshape(N, C, H, W)


def lrn_ref(x, local_size=1, alpha=1.0, beta=0.75):
    """Pure-JAX reference mirroring the PyTorch module (ACROSS_CHANNELS=True)."""
    N, C, H, W = x.shape
    pad = (local_size - 1) // 2
    sq = x.astype(jnp.float32) ** 2
    sq_p = jnp.pad(sq, ((0, 0), (pad, pad), (0, 0), (0, 0)))
    avg = sum(sq_p[:, k:k + C] for k in range(local_size)) / local_size
    div = (1.0 + alpha * avg) ** beta
    return (x / div).astype(x.dtype)


if __name__ == "__main__":
    key = jax.random.PRNGKey(0)
    k1, k2, k3, k4 = jax.random.split(key, 4)
    checks = []

    # 1) Module defaults (local_size=1 -> avg pool is identity).
    x1 = jax.random.normal(k1, (2, 4, 16, 16), dtype=jnp.float32)
    checks.append((lrn_pallas(x1), lrn_ref(x1)))

    # 2) Cross-channel window via the MXU band path (AlexNet-style params).
    checks.append((lrn_pallas(x1, local_size=3, alpha=1e-4, beta=0.75),
                   lrn_ref(x1, local_size=3, alpha=1e-4, beta=0.75)))

    # 3) Non-128-multiple spatial size -> last lane tile overhangs the array.
    x2 = jax.random.normal(k2, (2, 6, 13, 13), dtype=jnp.float32)
    checks.append((lrn_pallas(x2, local_size=5, alpha=2e-4),
                   lrn_ref(x2, local_size=5, alpha=2e-4)))

    # 4) Single image -> exercises the >=2-grid-steps (megacore) split.
    x3 = jax.random.normal(k3, (1, 4, 24, 24), dtype=jnp.float32)
    checks.append((lrn_pallas(x3, local_size=3, alpha=1e-3),
                   lrn_ref(x3, local_size=3, alpha=1e-3)))

    # 5) Force multiple balanced spatial tiles + overhanging tail tile.
    checks.append((lrn_pallas(x3, local_size=3, alpha=1e-3, max_block_elems=1024),
                   lrn_ref(x3, local_size=3, alpha=1e-3)))

    # 6) Force the large-C roll/mask path (chosen automatically for C >= 256).
    x4 = jax.random.normal(k4, (1, 8, 9, 9), dtype=jnp.float32)
    checks.append((lrn_pallas(x4, local_size=5, alpha=1e-2, channel_sum_mode="roll"),
                   lrn_ref(x4, local_size=5, alpha=1e-2)))

    for out, ref in checks:
        jax.block_until_ready(out)
        assert out.shape == ref.shape
        assert jnp.allclose(out, ref, atol=1e-5, rtol=1e-5), \
            float(jnp.max(jnp.abs(out - ref)))
    print("KERNEL_OK")
</pallas_src>

<mosaic_0001>
module attributes {stable_mosaic.version = 11 : i64} {
  func.func @_lrn_kernel(%arg0: i32, %arg1: i32, %arg2: memref<1x4x256xf32, #tpu.memory_space<vmem>>, %arg3: memref<1x4x256xf32, #tpu.memory_space<vmem>>) attributes {dimension_semantics = [#tpu.dimension_semantics<parallel>, #tpu.dimension_semantics<parallel>], iteration_bounds = array<i64: 2, 1>, scalar_prefetch = 0 : i64, scratch_operands = 0 : i64, tpu.core_type = #tpu.core_type<tc>, window_params = [{transform_indices = @transform_0, window_bounds = array<i64: 1, 4, 256>}, {transform_indices = @transform_1, window_bounds = array<i64: 1, 4, 256>}]} {
    %c0 = arith.constant 0 : index
    %c0_0 = arith.constant 0 : index
    %c0_1 = arith.constant 0 : index
    %0 = vector.load %arg2[%c0, %c0_0, %c0_1] : memref<1x4x256xf32, #tpu.memory_space<vmem>>, vector<1x4x256xf32>
    %1 = vector.shape_cast %0 : vector<1x4x256xf32> to vector<4x256xf32>
    %2 = arith.mulf %1, %1 : vector<4x256xf32>
    %cst = arith.constant 1.000000e+00 : f32
    %3 = vector.broadcast %cst : f32 to vector<4x256xf32>
    %4 = arith.mulf %3, %2 : vector<4x256xf32>
    %cst_2 = arith.constant 1.000000e+00 : f32
    %5 = vector.broadcast %cst_2 : f32 to vector<4x256xf32>
    %6 = arith.addf %5, %4 : vector<4x256xf32>
    %7 = math.rsqrt %6 : vector<4x256xf32>
    %8 = math.sqrt %7 : vector<4x256xf32>
    %9 = arith.mulf %7, %8 : vector<4x256xf32>
    %10 = arith.mulf %1, %9 : vector<4x256xf32>
    %c0_3 = arith.constant 0 : index
    %c0_4 = arith.constant 0 : index
    %c0_5 = arith.constant 0 : index
    %11 = vector.load %arg3[%c0_3, %c0_4, %c0_5] : memref<1x4x256xf32, #tpu.memory_space<vmem>>, vector<1x4x256xf32>
    %12 = vector.shape_cast %11 : vector<1x4x256xf32> to vector<4x256xf32>
    %13 = vector.shape_cast %10 : vector<4x256xf32> to vector<1x4x256xf32>
    tpu.vector_store %arg3[%c0_3, %c0_4, %c0_5], %13 {strides = array<i32>} : memref<1x4x256xf32, #tpu.memory_space<vmem>>, vector<1x4x256xf32>,
    return
  }
  func.func @transform_0(%arg0: i32, %arg1: i32) -> (i32, i32, i32) {
    %c0_i32 = arith.constant 0 : i32
    %c0_i32_0 = arith.constant 0 : i32
    return %arg0, %c0_i32, %arg1 : i32, i32, i32
  }
  func.func @transform_1(%arg0: i32, %arg1: i32) -> (i32, i32, i32) {
    %c0_i32 = arith.constant 0 : i32
    %c0_i32_0 = arith.constant 0 : i32
    return %arg0, %c0_i32, %arg1 : i32, i32, i32
  }
}

</mosaic_0001>

<llo_original>
// kernel: tpu_custom_call.1
$region0: #{tpu_custom_call.1}
  #allocation0 [shape = 'u32[]', space=smem, size = 0x4, offset = 0x4, fixed_abs, tag = 'smem constant byte address 0x4 - core index']
  #allocation1 [shape = 'u32[144,128]{1,0:T(1,128)}', space=vmem, size = 0x12000, scoped, tag = 'internal scratch']
  %s0 = inlined_call_operand.hbm [shape: f32[2,4,256], index: 0, kind: input, shape index: {}]
  %s1 = inlined_call_operand.hbm [shape: f32[2,4,256], index: 1, kind: output, shape index: {}]
  %s2 = sld [smem:[#allocation0]]
  $region41: #{tpu_custom_call.1} parent=0
    _
  %s4 = ssub.s32 1, %s2
  %s5 = scalar_select 0, %s4, %s2
  $region1: #{tpu_custom_call.1} parent=0
    #allocation2 [shape = 'u8[8192]{0}', space=vmem, size = 0x2000, scoped, tag = 'input window, operand 0']
    #allocation3 [shape = 's32[2]{0}', space=sflag, size = 0x8, scoped, tag = 'scoped memory for tpu_custom_call.1']
    #allocation4 [shape = 's32[2]{0}', space=sflag, size = 0x8, scoped, tag = 'scoped memory for tpu_custom_call.1']
    #allocation5 [shape = 'u8[8192]{0}', space=vmem, size = 0x2000, scoped, tag = 'output window, operand 0']
    %6 = vsyncpa [#allocation3], 0
    %s7 = scalar_lea.sflag [#allocation3], 1
    %8 = vsyncpa %s7, 0
    %9 = vsyncpa [#allocation4], 0
    %s10 = scalar_lea.sflag [#allocation4], 1
    %11 = vsyncpa %s10, 0
    loop: start=0, step=1, limit=4
    $region2: #{tpu_custom_call.1} parent=1 // loop_pre_header
      _
    $region3: #{tpu_custom_call.1} parent=1 // loop_header
      %s13 = sphi 0, %s17
      %p14 = scmp.ge.s32.totalorder %s13, 4
      %s20 = sphi 0, %s32
      %s21 = sphi 0, %s28
      %s22 = sphi 0, %s20
      %s23 = sphi 0, %s21
      %s24 = sphi 0, %s22
      %s25 = sphi 0, %s23
      %s37 = sphi 0, %s39
      %s40 = sphi 0, %s37
      %s41 = sphi 0, %s40
      %s57 = sphi 0, %s41
      %s65 = sphi 0, %s67
      %s68 = sphi 0, %s65
      %s69 = sphi 0, %s68
      %s85 = sphi 0, %s69
    $region4: #{tpu_custom_call.1} parent=1 // loop_header_branch
      %16 = sbr.rel (%p14) target = $region8
    $region5: #{tpu_custom_call.1} parent=1 // loop_body
      %s18 = ssub.s32 %s13, 1
      %s19 = ssub.s32 %s13, 2
      %s26 = sadd.s32 1, %s21
      %p27 = scmp.ge.s32.totalorder %s26, 1
      %s28 = scalar_select %p27, 0, %s26
      %s29 = sadd.s32 1, %s20
      %s30 = scalar_select %p27, %s29, %s20
      %p31 = scmp.ge.s32.totalorder %s30, 2
      %s32 = scalar_select %p31, 0, %s30
      %s33 = ssub.s32 %s20, %s32
      %s34 = ssub.s32 %s21, %s28
      %s35 = sor.u32 %s33, %s34
      %p36 = scmp.eq.s32.totalorder %s35, 0
      %s38 = sadd.s32 %s37, 1
      %s39 = scalar_select %p36, %s37, %s38
      %p42 = pneg %p36
      %p43 = scmp.eq.s32.totalorder %s13, 1
      %p44 = por %p42, %p43
      %p45 = scmp.ne.s32.totalorder %s37, %s40
      %p46 = scmp.eq.s32.totalorder %s13, 0
      %p47 = por %p45, %p46
      %p48 = scmp.ne.s32.totalorder %s37, %s40
      %p49 = scmp.eq.s32.totalorder %s18, 1
      %p50 = por %p48, %p49
      %p51 = scmp.ne.s32.totalorder %s40, %s41
      %p52 = scmp.eq.s32.totalorder %s18, 0
      %p53 = por %p51, %p52
      %p54 = scmp.ne.s32.totalorder %s40, %s41
      %p55 = scmp.eq.s32.totalorder %s19, 1
      %p56 = por %p54, %p55
      %p58 = scmp.ne.s32.totalorder %s41, %s57
      %p59 = scmp.eq.s32.totalorder %s19, 0
      %p60 = por %p58, %p59
      %s61 = ssub.s32 %s20, %s32
      %s62 = ssub.s32 %s21, %s28
      %s63 = sor.u32 %s61, %s62
      %p64 = scmp.eq.s32.totalorder %s63, 0
      %s66 = sadd.s32 %s65, 1
      %s67 = scalar_select %p64, %s65, %s66
      %p70 = pneg %p64
      %p71 = scmp.eq.s32.totalorder %s13, 1
      %p72 = por %p70, %p71
      %p73 = scmp.ne.s32.totalorder %s65, %s68
      %p74 = scmp.eq.s32.totalorder %s13, 0
      %p75 = por %p73, %p74
      %p76 = scmp.ne.s32.totalorder %s65, %s68
      %p77 = scmp.eq.s32.totalorder %s18, 1
      %p78 = por %p76, %p77
      %p79 = scmp.ne.s32.totalorder %s68, %s69
      %p80 = scmp.eq.s32.totalorder %s18, 0
      %p81 = por %p79, %p80
      %p82 = scmp.ne.s32.totalorder %s68, %s69
      %p83 = scmp.eq.s32.totalorder %s19, 1
      %p84 = por %p82, %p83
      %p86 = scmp.ne.s32.totalorder %s69, %s85
      %p87 = scmp.eq.s32.totalorder %s19, 0
      %p88 = por %p86, %p87
      %p89 = scmp.le.s32.totalorder 1, %s13
      %p90 = scmp.lt.s32.totalorder %s13, 3
      %p91 = pnand %p89, %p90
      %p92 = pneg %p91
      // Predicated region
      $region9: #{tpu_custom_call.1} parent=5 // pred_check
        _
      $region10: #{tpu_custom_call.1} parent=5 // pred_check_branch
        %94 = sbr.rel (%p91) target = $region12
      $region11: #{tpu_custom_call.1} parent=5 // pred_region
        %s95 = ssub.s32 %s13, 1
      $region12: #{tpu_custom_call.1} parent=5 // pred_fallthru
        _
      %p96 = scmp.lt.s32.totalorder %s13, 2
      // Predicated region
      $region13: #{tpu_custom_call.1} parent=5 // pred_check
        %p97 = pneg %p96
      $region14: #{tpu_custom_call.1} parent=5 // pred_check_branch
        %99 = sbr.rel (%p97) target = $region16
      $region15: #{tpu_custom_call.1} parent=5 // pred_region
        // Predicated region
        $region17: #{tpu_custom_call.1} parent=15 // pred_check
          %p100 = pneg %p47
        $region18: #{tpu_custom_call.1} parent=15 // pred_check_branch
          %102 = sbr.rel (%p100) target = $region20
        $region19: #{tpu_custom_call.1} parent=15 // pred_region
          %s103 = sand.u32 %s37, 1
          %s104 = scalar_lea.sflag [#allocation3], %s103
          %s105 = sand.u32 %s37, 1
          %s106 = smul.addr %s105, 8
          %s107 = scalar_lea.vmem [#allocation2], %s106
          %s108 = smul.u32 2, %s21
          %s110 = ssub.s32 128, 128
          %111 = vsyncadd %s104, %s110
          %s112 = smul.addr %s20, 2
          %s113 = sadd.s32 %s108, %s112
          %s114 = smul.addr %s113, 64
          %s115 = scalar_lea.hbm %s0, %s114
          %s117 = sshll.u32 %s107, 4
          %s118 = int_to_ptr.vmem [resolvable:$true] %s117
          %120 = dma.hbm_to_vmem [thread:$0]  %s115, 128, %s118, %s104
        $region20: #{tpu_custom_call.1} parent=15 // pred_fallthru
          _
      $region16: #{tpu_custom_call.1} parent=5 // pred_fallthru
        _
      %p121 = scmp.le.s32.totalorder 1, %s13
      %p122 = scmp.lt.s32.totalorder %s13, 3
      %p123 = pnand %p121, %p122
      %p124 = pneg %p123
      // Predicated region
      $region21: #{tpu_custom_call.1} parent=5 // pred_check
        _
      $region22: #{tpu_custom_call.1} parent=5 // pred_check_branch
        %126 = sbr.rel (%p123) target = $region24
      $region23: #{tpu_custom_call.1} parent=5 // pred_region
        %s127 = ssub.s32 %s13, 1
        %s128 = sand.u32 %s40, 1
        %s129 = scalar_lea.sflag [#allocation3], %s128
        %s130 = sand.u32 %s40, 1
        %s131 = smul.addr %s130, 8
        %s132 = scalar_lea.vmem [#allocation2], %s131
        // Predicated region
        $region25: #{tpu_custom_call.1} parent=23 // pred_check
          %p133 = pneg %p53
        $region26: #{tpu_custom_call.1} parent=23 // pred_check_branch
          %135 = sbr.rel (%p133) target = $region28
        $region27: #{tpu_custom_call.1} parent=23 // pred_region
          %136 = dma.done %s129, 128
        $region28: #{tpu_custom_call.1} parent=23 // pred_fallthru
          _
        %s137 = sand.u32 %s40, 1
        %s138 = scalar_lea.sflag [#allocation3], %s137
        %s139 = sand.u32 %s40, 1
        %s140 = smul.addr %s139, 8
        %s141 = scalar_lea.vmem [#allocation2], %s140
        %p142 = pneg %p53
        %p143 = pneg %p50
        %p144 = pneg %p81
        %p145 = pneg %p78
        %s146 = sand.u32 %s68, 1
        %s147 = scalar_lea.sflag [#allocation4], %s146
        %s148 = sand.u32 %s68, 1
        %s149 = smul.addr %s148, 8
        %s150 = scalar_lea.vmem [#allocation5], %s149
        %s151 = smul.u32 2, %s23
        %s152 = smul.u32 2, %s23
        %v153 = vld [vmem:[%s132] sm:$0xff]
        %v154 = vmul.f32 %v153, %v153
        %v155 = vadd.f32 %v154, 1.0
        %v156 = vrsqrt.pop %v155
        %v157 = vrsqrt.pop %v156
        %v158 = vmul.f32 %v156, %v157
        %vm159 = vcmp.eq.f32.partialorder %v156, inf
        %v160 = vsel %vm159, %v156, %v158
        %vm161 = vcmp.eq.f32.partialorder %v156, 0.0
        %v162 = vand.u32 %v156, 2147483648
        %v163 = vsel %vm161, %v162, %v160
        %v164 = vmul.f32 %v156, %v163
        %v165 = vmul.f32 %v153, %v164
        %166 = vst [vmem:[%s150] sm:$0xff] %v165
        %s167 = sand.u32 %s68, 1
        %s168 = scalar_lea.sflag [#allocation4], %s167
        %s169 = sand.u32 %s68, 1
        %s170 = smul.addr %s169, 8
        %s171 = scalar_lea.vmem [#allocation5], %s170
        // Predicated region
        $region29: #{tpu_custom_call.1} parent=23 // pred_check
          %p172 = pneg %p78
        $region30: #{tpu_custom_call.1} parent=23 // pred_check_branch
          %174 = sbr.rel (%p172) target = $region32
        $region31: #{tpu_custom_call.1} parent=23 // pred_region
          %s175 = smul.u32 2, %s23
          %s177 = ssub.s32 128, 128
          %178 = vsyncadd %s168, %s177
          %s179 = smul.addr %s22, 2
          %s180 = sadd.s32 %s175, %s179
          %s181 = smul.addr %s180, 64
          %s182 = scalar_lea.hbm %s1, %s181
          %s184 = sshll.u32 %s171, 4
          %s185 = int_to_ptr.vmem [resolvable:$true] %s184
          %187 = dma.vmem_to_hbm [thread:$0]  %s185, 128, %s182, %s168
        $region32: #{tpu_custom_call.1} parent=23 // pred_fallthru
          _
      $region24: #{tpu_custom_call.1} parent=5 // pred_fallthru
        _
      %p188 = scmp.le.s32.totalorder 2, %s13
      // Predicated region
      $region33: #{tpu_custom_call.1} parent=5 // pred_check
        %p189 = pneg %p188
      $region34: #{tpu_custom_call.1} parent=5 // pred_check_branch
        %191 = sbr.rel (%p189) target = $region36
      $region35: #{tpu_custom_call.1} parent=5 // pred_region
        %s192 = ssub.s32 %s13, 2
        // Predicated region
        $region37: #{tpu_custom_call.1} parent=35 // pred_check
          %p193 = pneg %p84
        $region38: #{tpu_custom_call.1} parent=35 // pred_check_branch
          %195 = sbr.rel (%p193) target = $region40
        $region39: #{tpu_custom_call.1} parent=35 // pred_region
          %s196 = sand.u32 %s69, 1
          %s197 = scalar_lea.sflag [#allocation4], %s196
          %s198 = sand.u32 %s69, 1
          %s199 = smul.addr %s198, 8
          %s200 = scalar_lea.vmem [#allocation5], %s199
          %201 = dma.done %s197, 128
        $region40: #{tpu_custom_call.1} parent=35 // pred_fallthru
          _
      $region36: #{tpu_custom_call.1} parent=5 // pred_fallthru
        _
    $region6: #{tpu_custom_call.1} parent=1 // loop_footer
      %s17 = sadd.s32 1, %s13
    $region7: #{tpu_custom_call.1} parent=1 // loop_footer_branch
      %12 = sbr.rel target = $region3
    $region8: #{tpu_custom_call.1} parent=1 // loop_exit
      _
    %202 = vsyncpa [#allocation3], 1
    %s203 = scalar_lea.sflag [#allocation3], 1
    %204 = vsyncpa %s203, 1
    %205 = vsyncpa [#allocation4], 1
    %s206 = scalar_lea.sflag [#allocation4], 1
    %207 = vsyncpa %s206, 1

</llo_original>
